<compile_context>
chip_gen: v6e
topology: v6e:2x2x1
jax: 0.10.0
libtpu: 0.0.40
codegen_flags: <defaults>
</compile_context>

<pallas_src>
import functools

import jax
import jax.numpy as jnp
from jax.experimental import pallas as pl
from jax.experimental.pallas import tpu as pltpu


def _round_up(x, m):
    return ((x + m - 1) // m) * m


def _pad_to(arr, shape):
    pads = [(0, t - s) for s, t in zip(arr.shape, shape)]
    if all(p == (0, 0) for p in pads):
        return arr
    return jnp.pad(arr, pads)


# ---------------------------------------------------------------------------
# Kernel 1: per-node-tile fused linear  ->  XW_l  and  X@W_r + b_l
# ---------------------------------------------------------------------------
def _sage_linear_kernel(x_ref, w_ref, bl_ref, xwl_ref, self_ref, *, co_p,
                        compute_dtype):
    """x_ref: (tile_n, Cin_p); w_ref: (Cin_p, 2*Cout_p) = [W_l | W_r];
    bl_ref: (1, Cout_p) f32.  One MXU matmul drives both outputs."""
    x = x_ref[...].astype(compute_dtype)
    y = jnp.dot(x, w_ref[...], preferred_element_type=jnp.float32)
    xwl_ref[...] = y[:, :co_p].astype(xwl_ref.dtype)
    self_ref[...] = (y[:, co_p:] + bl_ref[...]).astype(self_ref.dtype)


# ---------------------------------------------------------------------------
# Kernel 2: K-tiled aggregation  out = A @ XW_l + self  (+ epilogue)
# ---------------------------------------------------------------------------
def _sage_agg_kernel(a_ref, xwl_ref, self_ref, o_ref, acc_ref, *, tile_k,
                     xwl_resident, c_out_valid, apply_relu, apply_log_softmax):
    """a_ref: (tile_n, tile_k); xwl_ref: (tile_k, Cout_p) or resident
    (n_pad, Cout_p); self_ref: (tile_n, Cout_p); acc_ref: f32 VMEM scratch."""
    k = pl.program_id(1)

    # Initialize the accumulator with the self term (no zero-fill + late add).
    @pl.when(k == 0)
    def _():
        acc_ref[...] = self_ref[...].astype(jnp.float32)

    if xwl_resident:
        k0 = pl.multiple_of(k * tile_k, tile_k)
        xwl = xwl_ref[pl.ds(k0, tile_k), :]
    else:
        xwl = xwl_ref[...]

    acc_ref[...] += jnp.dot(a_ref[...], xwl, preferred_element_type=jnp.float32)

    @pl.when(k == pl.num_programs(1) - 1)
    def _():
        out = acc_ref[...]
        if apply_relu:
            out = jnp.maximum(out, 0.0)
        if apply_log_softmax:
            # Mask lane-padded channels out of the row-wise log_softmax (f32).
            col = jax.lax.broadcasted_iota(jnp.int32, out.shape, 1)
            masked = jnp.where(col < c_out_valid, out, -1e30)
            m = jnp.max(masked, axis=-1, keepdims=True)
            shifted = masked - m
            lse = jnp.log(jnp.sum(jnp.exp(shifted), axis=-1, keepdims=True))
            out = shifted - lse
        o_ref[...] = out.astype(o_ref.dtype)


# ---------------------------------------------------------------------------
# One fused SAGEConv layer on pre-padded operands.
# ---------------------------------------------------------------------------
def sage_conv_layer_padded(a_p, x_p, w_cat_p, bl_p, *, apply_relu,
                           apply_log_softmax, c_out_valid, tile_n, tile_k,
                           compute_dtype, out_dtype, xwl_resident,
                           a_buffer_count=2, vmem_limit_bytes=None):
    n_pad, ci_p = x_p.shape
    co2 = w_cat_p.shape[1]
    co_p = co2 // 2
    assert n_pad % tile_n == 0 and n_pad % tile_k == 0

    cb = jnp.dtype(compute_dtype).itemsize
    ob = jnp.dtype(out_dtype).itemsize
    xb = jnp.dtype(x_p.dtype).itemsize

    if vmem_limit_bytes is None:
        # Double-buffered footprint estimates for both kernels.
        k1 = (2 * tile_n * ci_p * xb            # X tile
              + 2 * ci_p * co2 * cb             # fused weight (budget 2x)
              + 2 * 8 * co_p * 4                # bias (tile-padded)
              + 4 * tile_n * co_p * cb)         # the two outputs
        xwl_b = (2 * n_pad * co_p * cb) if xwl_resident else (2 * tile_k * co_p * cb)
        k2 = (2 * tile_n * tile_k * cb + xwl_b
              + 2 * tile_n * co_p * cb          # self term
              + 2 * tile_n * co_p * ob          # output
              + tile_n * co_p * 4)              # f32 accumulator
        est = max(k1, k2)
        # >= v6e/v7x scoped default, above v5e's 16 MiB default, and capped
        # to keep headroom on v7x's 64 MiB physical VMEM.
        vmem_limit_bytes = int(min(48 * 2**20, max(32 * 2**20, est + 8 * 2**20)))

    cparams = dict(vmem_limit_bytes=vmem_limit_bytes)

    # ---- kernel 1: fused [XW_l | XW_r + b] ---------------------------------
    xwl, self_term = pl.pallas_call(
        functools.partial(_sage_linear_kernel, co_p=co_p,
                          compute_dtype=compute_dtype),
        out_shape=(jax.ShapeDtypeStruct((n_pad, co_p), compute_dtype),
                   jax.ShapeDtypeStruct((n_pad, co_p), compute_dtype)),
        grid=(n_pad // tile_n,),
        in_specs=[
            pl.BlockSpec((tile_n, ci_p), lambda i: (i, 0)),   # X rows
            pl.BlockSpec((ci_p, co2), lambda i: (0, 0)),      # [W_l | W_r]
            pl.BlockSpec((1, co_p), lambda i: (0, 0)),        # b_l
        ],
        out_specs=(pl.BlockSpec((tile_n, co_p), lambda i: (i, 0)),
                   pl.BlockSpec((tile_n, co_p), lambda i: (i, 0))),
        compiler_params=pltpu.CompilerParams(
            dimension_semantics=("parallel",), **cparams),
    )(x_p, w_cat_p, bl_p)

    # ---- kernel 2: K-tiled A @ XW_l (+ self in acc), with epilogue ---------
    if xwl_resident:
        xwl_spec = pl.BlockSpec((n_pad, co_p), lambda i, k: (0, 0))   # load once
    else:
        xwl_spec = pl.BlockSpec((tile_k, co_p), lambda i, k: (k, 0))

    if a_buffer_count == 2:
        a_spec = pl.BlockSpec((tile_n, tile_k), lambda i, k: (i, k))
    else:
        a_spec = pl.BlockSpec((tile_n, tile_k), lambda i, k: (i, k),
                              pipeline_mode=pl.Buffered(a_buffer_count))

    out = pl.pallas_call(
        functools.partial(_sage_agg_kernel, tile_k=tile_k,
                          xwl_resident=xwl_resident, c_out_valid=c_out_valid,
                          apply_relu=apply_relu,
                          apply_log_softmax=apply_log_softmax),
        out_shape=jax.ShapeDtypeStruct((n_pad, co_p), out_dtype),
        grid=(n_pad // tile_n, n_pad // tile_k),
        in_specs=[a_spec, xwl_spec,
                  pl.BlockSpec((tile_n, co_p), lambda i, k: (i, 0))],
        out_specs=pl.BlockSpec((tile_n, co_p), lambda i, k: (i, 0)),
        scratch_shapes=[pltpu.VMEM((tile_n, co_p), jnp.float32)],
        compiler_params=pltpu.CompilerParams(
            dimension_semantics=("parallel", "arbitrary"), **cparams),
    )(a_p, xwl, self_term)
    return out


# ---------------------------------------------------------------------------
# Full SAGE forward (inference mode).
# ---------------------------------------------------------------------------
def sage_forward(x, a_norm, params, *, tile_n=512, tile_k=2048,
                 compute_dtype=jnp.bfloat16, xwl_resident=None,
                 a_buffer_count=2, vmem_limit_bytes=None):
    """SAGE.forward in inference mode (dropout is identity).

    x      : (N, Cin) f32 node features
    a_norm : (N, N)   f32 row-normalized dense adjacency
    params : list of (W_l [Cin,Cout], b_l [Cout], W_r [Cin,Cout]) per layer
    """
    # TODO(synk): training-mode dropout between layers is not implemented
    # (F.dropout with training=False is the identity).
    # TODO(synk): on v7x, a_norm could additionally be stored in fp8 (e4m3)
    # with a per-row scale folded into XW_l to halve the O(N^2) HBM stream.
    assert tile_n % 128 == 0 and tile_k % 128 == 0
    n, c0 = x.shape
    num_layers = len(params)
    c_final = params[-1][0].shape[1]

    n128 = _round_up(n, 128)
    tn = min(tile_n, n128)
    # v7x megacore: prefer >= 2 node tiles so the "parallel" axis can split
    # across both TensorCores (only changes anything for small graphs).
    if n128 // tn < 2 and n128 >= 256:
        tn = 128 * max(1, (n128 // 2) // 128)
    n_pad = _round_up(n, tn)

    # K tile: largest multiple of 128 that divides n_pad and is <= tile_k,
    # so the K tiling adds NO extra padded rows/columns of A.
    tk_req = max(128, min(tile_k, n_pad))
    nt = n_pad // 128
    best = 1
    for m in range(1, tk_req // 128 + 1):
        if nt % m == 0:
            best = m
    tk = 128 * best

    cb = jnp.dtype(compute_dtype).itemsize

    a_p = _pad_to(a_norm, (n_pad, n_pad)).astype(compute_dtype)
    h = _pad_to(x, (n_pad, _round_up(c0, 128))).astype(jnp.float32)

    for li, (wl, bl, wr) in enumerate(params):
        last = li == num_layers - 1
        c_in, c_out = wl.shape
        ci_p, co_p = _round_up(c_in, 128), _round_up(c_out, 128)
        assert h.shape[1] == ci_p
        # Fuse [W_l | W_r] so kernel 1 is one MXU matmul with a 2*co_p-wide
        # output (fills the 256-wide MXU on v6e/v7x).
        w_cat = jnp.concatenate(
            [_pad_to(wl, (ci_p, co_p)), _pad_to(wr, (ci_p, co_p))],
            axis=1).astype(compute_dtype)
        bl_p = _pad_to(bl.reshape(1, c_out), (1, co_p)).astype(jnp.float32)

        if xwl_resident is None:
            # Resident XW_l eliminates all re-reads; safe when its (budgeted
            # double-buffered) footprint stays well inside v7x's 64 MiB.
            resident = 2 * n_pad * co_p * cb <= 24 * 2**20
        else:
            resident = bool(xwl_resident)

        h = sage_conv_layer_padded(
            a_p, h, w_cat, bl_p,
            apply_relu=not last,
            apply_log_softmax=last,
            c_out_valid=c_out,
            tile_n=tn, tile_k=tk,
            compute_dtype=compute_dtype,
            out_dtype=jnp.float32 if last else compute_dtype,
            xwl_resident=resident,
            a_buffer_count=a_buffer_count,
            vmem_limit_bytes=vmem_limit_bytes,
        )
    return h[:n, :c_final]


# ---------------------------------------------------------------------------
# Pure-JAX reference (mirrors the kernel's dtype handling).
# ---------------------------------------------------------------------------
def sage_forward_ref(x, a_norm, params, compute_dtype=jnp.float32):
    num_layers = len(params)
    a = a_norm.astype(compute_dtype)
    h = x
    for li, (wl, bl, wr) in enumerate(params):
        hc = h.astype(compute_dtype)
        xwl = jnp.dot(hc, wl.astype(compute_dtype),
                      preferred_element_type=jnp.float32).astype(compute_dtype)
        self_t = (jnp.dot(hc, wr.astype(compute_dtype),
                          preferred_element_type=jnp.float32)
                  + bl).astype(compute_dtype)
        out = (jnp.dot(a, xwl, preferred_element_type=jnp.float32)
               + self_t.astype(jnp.float32))
        if li < num_layers - 1:
            h = jnp.maximum(out, 0.0).astype(compute_dtype)
        else:
            h = jax.nn.log_softmax(out, axis=-1)
    return h


def init_linear(key, c_in, c_out, with_bias=True):
    """torch.nn.Linear-style init: U(-1/sqrt(c_in), 1/sqrt(c_in))."""
    bound = 1.0 / jnp.sqrt(jnp.float32(c_in))
    k_w, k_b = jax.random.split(key)
    w = jax.random.uniform(k_w, (c_in, c_out), jnp.float32, -bound, bound)
    b = (jax.random.uniform(k_b, (c_out,), jnp.float32, -bound, bound)
         if with_bias else jnp.zeros((c_out,), jnp.float32))
    return w, b


if __name__ == "__main__":
    key = jax.random.PRNGKey(0)

    # Small synthetic graph / model sizes.
    N = 256                # number of nodes
    IN_CH = 16             # input feature channels
    HIDDEN = 32            # hidden channels
    OUT_CH = 8             # output classes
    NUM_LAYERS = 3

    k_x, k_adj, k_params = jax.random.split(key, 3)

    # Node features.
    x = jax.random.normal(k_x, (N, IN_CH), jnp.float32)

    # Random sparse-ish adjacency (dense representation), mean-normalized.
    adj = (jax.random.uniform(k_adj, (N, N)) < 0.1).astype(jnp.float32)
    deg = jnp.sum(adj, axis=1, keepdims=True)
    a_norm = adj / jnp.maximum(deg, 1.0)

    # Per-layer parameters: (W_l [Cin,Cout], b_l [Cout], W_r [Cin,Cout]).
    dims = [IN_CH] + [HIDDEN] * (NUM_LAYERS - 1) + [OUT_CH]
    params = []
    layer_keys = jax.random.split(k_params, NUM_LAYERS)
    for li in range(NUM_LAYERS):
        c_in, c_out = dims[li], dims[li + 1]
        k_l, k_r = jax.random.split(layer_keys[li])
        wl, bl = init_linear(k_l, c_in, c_out, with_bias=True)
        wr, _ = init_linear(k_r, c_in, c_out, with_bias=False)
        params.append((wl, bl, wr))

    ref_f32 = sage_forward_ref(x, a_norm, params, compute_dtype=jnp.float32)

    # (a) f32 compute, small tiles, K-tiled XW_l path (2 node tiles, 2 K steps).
    out_a = sage_forward(x, a_norm, params, tile_n=128, tile_k=128,
                         compute_dtype=jnp.float32, xwl_resident=False)
    out_a = jax.block_until_ready(out_a)
    assert out_a.shape == (N, OUT_CH)
    assert jnp.allclose(out_a, ref_f32, atol=1e-3, rtol=1e-3), \
        "f32 K-tiled kernel mismatch vs reference"

    # (b) f32 compute, default (auto-clamped) tiles -> resident XW_l path.
    out_b = sage_forward(x, a_norm, params, compute_dtype=jnp.float32)
    out_b = jax.block_until_ready(out_b)
    assert out_b.shape == (N, OUT_CH)
    assert jnp.allclose(out_b, ref_f32, atol=1e-3, rtol=1e-3), \
        "f32 resident-XW_l kernel mismatch vs reference"

    # (c) bf16 production config (default): check vs bf16 reference.
    out_c = sage_forward(x, a_norm, params)
    out_c = jax.block_until_ready(out_c)
    ref_bf16 = sage_forward_ref(x, a_norm, params, compute_dtype=jnp.bfloat16)
    assert out_c.shape == (N, OUT_CH)
    assert jnp.allclose(out_c, ref_bf16, atol=5e-2, rtol=5e-2), \
        "bf16 kernel mismatch vs reference"

    print("KERNEL_OK")
</pallas_src>

<mosaic_0001>
module attributes {stable_mosaic.version = 11 : i64} {
  func.func @_sage_linear_kernel(%arg0: i32, %arg1: memref<128x128xf32, #tpu.memory_space<vmem>>, %arg2: memref<128x256xf32, #tpu.memory_space<vmem>>, %arg3: memref<1x128xf32, #tpu.memory_space<vmem>>, %arg4: memref<128x128xf32, #tpu.memory_space<vmem>>, %arg5: memref<128x128xf32, #tpu.memory_space<vmem>>) attributes {dimension_semantics = [#tpu.dimension_semantics<parallel>], iteration_bounds = array<i64: 2>, scalar_prefetch = 0 : i64, scratch_operands = 0 : i64, tpu.core_type = #tpu.core_type<tc>, window_params = [{transform_indices = @transform_0, window_bounds = array<i64: 128, 128>}, {pipeline_mode = #tpu.pipeline_mode<synchronous>, transform_indices = @transform_1, window_bounds = array<i64: 128, 256>}, {pipeline_mode = #tpu.pipeline_mode<synchronous>, transform_indices = @transform_2, window_bounds = array<i64: 1, 128>}, {transform_indices = @transform_3, window_bounds = array<i64: 128, 128>}, {transform_indices = @transform_4, window_bounds = array<i64: 128, 128>}]} {
    %c0 = arith.constant 0 : index
    %c0_0 = arith.constant 0 : index
    %0 = vector.load %arg1[%c0, %c0_0] : memref<128x128xf32, #tpu.memory_space<vmem>>, vector<128x128xf32>
    %c0_1 = arith.constant 0 : index
    %c0_2 = arith.constant 0 : index
    %1 = vector.load %arg2[%c0_1, %c0_2] : memref<128x256xf32, #tpu.memory_space<vmem>>, vector<128x256xf32>
    %cst = arith.constant dense<0.000000e+00> : vector<128x256xf32>
    %2 = tpu.matmul %0, %1, %cst {dimension_numbers = #tpu.dot_dimension_numbers<[1], [0], [0], [1], [0, 0, 1, 1], [], []>} : vector<128x128xf32>, vector<128x256xf32>, vector<128x256xf32> -> vector<128x256xf32>
    %3 = vector.extract_strided_slice %2 {offsets = [0, 0], sizes = [128, 128], strides = [1, 1]} : vector<128x256xf32> to vector<128x128xf32>
    %c0_3 = arith.constant 0 : index
    %c0_4 = arith.constant 0 : index
    %4 = vector.load %arg4[%c0_3, %c0_4] : memref<128x128xf32, #tpu.memory_space<vmem>>, vector<128x128xf32>
    tpu.vector_store %arg4[%c0_3, %c0_4], %3 {strides = array<i32>} : memref<128x128xf32, #tpu.memory_space<vmem>>, vector<128x128xf32>,
    %5 = vector.extract_strided_slice %2 {offsets = [0, 128], sizes = [128, 128], strides = [1, 1]} : vector<128x256xf32> to vector<128x128xf32>
    %c0_5 = arith.constant 0 : index
    %c0_6 = arith.constant 0 : index
    %6 = vector.load %arg3[%c0_5, %c0_6] : memref<1x128xf32, #tpu.memory_space<vmem>>, vector<1x128xf32>
    %7 = vector.broadcast %6 : vector<1x128xf32> to vector<128x128xf32>
    %8 = arith.addf %5, %7 : vector<128x128xf32>
    %c0_7 = arith.constant 0 : index
    %c0_8 = arith.constant 0 : index
    %9 = vector.load %arg5[%c0_7, %c0_8] : memref<128x128xf32, #tpu.memory_space<vmem>>, vector<128x128xf32>
    tpu.vector_store %arg5[%c0_7, %c0_8], %8 {strides = array<i32>} : memref<128x128xf32, #tpu.memory_space<vmem>>, vector<128x128xf32>,
    return
  }
  func.func @transform_0(%arg0: i32) -> (i32, i32) {
    %c0_i32 = arith.constant 0 : i32
    %c0_i32_0 = arith.constant 0 : i32
    return %arg0, %c0_i32 : i32, i32
  }
  func.func @transform_1(%arg0: i32) -> (i32, i32) {
    %c0_i32 = arith.constant 0 : i32
    %c0_i32_0 = arith.constant 0 : i32
    %c0_i32_1 = arith.constant 0 : i32
    return %c0_i32, %c0_i32_0 : i32, i32
  }
  func.func @transform_2(%arg0: i32) -> (i32, i32) {
    %c0_i32 = arith.constant 0 : i32
    %c0_i32_0 = arith.constant 0 : i32
    %c0_i32_1 = arith.constant 0 : i32
    return %c0_i32, %c0_i32_0 : i32, i32
  }
  func.func @transform_3(%arg0: i32) -> (i32, i32) {
    %c0_i32 = arith.constant 0 : i32
    %c0_i32_0 = arith.constant 0 : i32
    return %arg0, %c0_i32 : i32, i32
  }
  func.func @transform_4(%arg0: i32) -> (i32, i32) {
    %c0_i32 = arith.constant 0 : i32
    %c0_i32_0 = arith.constant 0 : i32
    return %arg0, %c0_i32 : i32, i32
  }
}

</mosaic_0001>

<llo_original>
// kernel: tpu_custom_call.1
$region0: #{tpu_custom_call.1}
  #allocation0 [shape = 'u32[]', space=smem, size = 0x4, offset = 0x4, fixed_abs, tag = 'smem constant byte address 0x4 - core index']
  #allocation1 [shape = 'u32[144,128]{1,0:T(1,128)}', space=vmem, size = 0x12000, scoped, tag = 'internal scratch']
  %s0 = inlined_call_operand.hbm [shape: f32[256,128], index: 0, kind: input, shape index: {}]
  %s1 = inlined_call_operand.hbm [shape: f32[128,256], index: 1, kind: input, shape index: {}]
  %s2 = inlined_call_operand.vmem [shape: f32[1,128], index: 2, kind: input, shape index: {}]
  %s3 = inlined_call_operand.hbm [shape: f32[256,128], index: 3, kind: output, shape index: {0}]
  %s4 = inlined_call_operand.hbm [shape: f32[256,128], index: 4, kind: output, shape index: {1}]
  %5 = xla_tuple %s3, %s4
  %s6 = sld [smem:[#allocation0]]
  $region61: #{tpu_custom_call.1} parent=0
    _
  %s8 = ssub.s32 1, %s6
  %s9 = scalar_select 0, %s8, %s6
  $region1: #{tpu_custom_call.1} parent=0
    #allocation2 [shape = 'u8[131072]{0}', space=vmem, size = 0x20000, scoped, tag = 'input window, operand 0']
    #allocation3 [shape = 's32[2]{0}', space=sflag, size = 0x8, scoped, tag = 'scoped memory for tpu_custom_call.1']
    #allocation4 [shape = 's32[2]{0}', space=sflag, size = 0x8, scoped, tag = 'scoped memory for tpu_custom_call.1']
    #allocation5 [shape = 'u8[131072]{0}', space=vmem, size = 0x20000, scoped, tag = 'input window, operand 1, single buffered']
    #allocation6 [shape = 's32[1]{0}', space=sflag, size = 0x4, scoped, tag = 'scoped memory for tpu_custom_call.1']
    #allocation7 [shape = 'u8[131072]{0}', space=vmem, size = 0x20000, scoped, tag = 'output window, operand 0']
    #allocation8 [shape = 'u8[131072]{0}', space=vmem, size = 0x20000, scoped, tag = 'output window, operand 1']
    #allocation9 [shape = 's32[2]{0}', space=sflag, size = 0x8, scoped, tag = 'scoped memory for tpu_custom_call.1']
    %10 = vsyncpa [#allocation3], 0
    %s11 = scalar_lea.sflag [#allocation3], 1
    %12 = vsyncpa %s11, 0
    %13 = vsyncpa [#allocation6], 0
    %14 = vsyncpa [#allocation4], 0
    %s15 = scalar_lea.sflag [#allocation4], 1
    %16 = vsyncpa %s15, 0
    %17 = vsyncpa [#allocation9], 0
    %s18 = scalar_lea.sflag [#allocation9], 1
    %19 = vsyncpa %s18, 0
    loop: start=0, step=1, limit=4
    $region2: #{tpu_custom_call.1} parent=1 // loop_pre_header
      _
    $region3: #{tpu_custom_call.1} parent=1 // loop_header
      %s21 = sphi 0, %s25
      %p22 = scmp.ge.s32.totalorder %s21, 4
      %s31 = sphi 0, %s33
      %s34 = sphi 0, %s31
      %s35 = sphi 0, %s34
      %s51 = sphi 0, %s35
      %s55 = sphi 0, %s55
      %s57 = sphi 0, %s55
      %s58 = sphi 0, %s57
      %s72 = sphi 0, %s58
      %s76 = sphi 0, %s76
      %s78 = sphi 0, %s76
      %s79 = sphi 0, %s78
      %s93 = sphi 0, %s79
      %s99 = sphi 0, %s101
      %s102 = sphi 0, %s99
      %s103 = sphi 0, %s102
      %s119 = sphi 0, %s103
      %s125 = sphi 0, %s127
      %s128 = sphi 0, %s125
      %s129 = sphi 0, %s128
      %s145 = sphi 0, %s129
    $region4: #{tpu_custom_call.1} parent=1 // loop_header_branch
      %24 = sbr.rel (%p22) target = $region8
    $region5: #{tpu_custom_call.1} parent=1 // loop_body
      %s26 = ssub.s32 %s21, 1
      %s27 = ssub.s32 %s21, 2
      %s28 = sadd.s32 %s21, 1
      %s29 = ssub.s32 %s21, %s28
      %p30 = scmp.eq.s32.totalorder %s29, 0
      %s32 = sadd.s32 %s31, 1
      %s33 = scalar_select %p30, %s31, %s32
      %p36 = pneg %p30
      %p37 = scmp.eq.s32.totalorder %s21, 1
      %p38 = por %p36, %p37
      %p39 = scmp.ne.s32.totalorder %s31, %s34
      %p40 = scmp.eq.s32.totalorder %s21, 0
      %p41 = por %p39, %p40
      %p42 = scmp.ne.s32.totalorder %s31, %s34
      %p43 = scmp.eq.s32.totalorder %s26, 1
      %p44 = por %p42, %p43
      %p45 = scmp.ne.s32.totalorder %s34, %s35
      %p46 = scmp.eq.s32.totalorder %s26, 0
      %p47 = por %p45, %p46
      %p48 = scmp.ne.s32.totalorder %s34, %s35
      %p49 = scmp.eq.s32.totalorder %s27, 1
      %p50 = por %p48, %p49
      %p52 = scmp.ne.s32.totalorder %s35, %s51
      %p53 = scmp.eq.s32.totalorder %s27, 0
      %p54 = por %p52, %p53
      %s56 = sadd.s32 %s55, 1
      %p59 = scmp.eq.s32.totalorder %s21, 1
      %p60 = scmp.ne.s32.totalorder %s55, %s57
      %p61 = scmp.eq.s32.totalorder %s21, 0
      %p62 = por %p60, %p61
      %p63 = scmp.ne.s32.totalorder %s55, %s57
      %p64 = scmp.eq.s32.totalorder %s26, 1
      %p65 = por %p63, %p64
      %p66 = scmp.ne.s32.totalorder %s57, %s58
      %p67 = scmp.eq.s32.totalorder %s26, 0
      %p68 = por %p66, %p67
      %p69 = scmp.ne.s32.totalorder %s57, %s58
      %p70 = scmp.eq.s32.totalorder %s27, 1
      %p71 = por %p69, %p70
      %p73 = scmp.ne.s32.totalorder %s58, %s72
      %p74 = scmp.eq.s32.totalorder %s27, 0
      %p75 = por %p73, %p74
      %s77 = sadd.s32 %s76, 1
      %p80 = scmp.eq.s32.totalorder %s21, 1
      %p81 = scmp.ne.s32.totalorder %s76, %s78
      %p82 = scmp.eq.s32.totalorder %s21, 0
      %p83 = por %p81, %p82
      %p84 = scmp.ne.s32.totalorder %s76, %s78
      %p85 = scmp.eq.s32.totalorder %s26, 1
      %p86 = por %p84, %p85
      %p87 = scmp.ne.s32.totalorder %s78, %s79
      %p88 = scmp.eq.s32.totalorder %s26, 0
      %p89 = por %p87, %p88
      %p90 = scmp.ne.s32.totalorder %s78, %s79
      %p91 = scmp.eq.s32.totalorder %s27, 1
      %p92 = por %p90, %p91
      %p94 = scmp.ne.s32.totalorder %s79, %s93
      %p95 = scmp.eq.s32.totalorder %s27, 0
      %p96 = por %p94, %p95
      %s97 = ssub.s32 %s21, %s28
      %p98 = scmp.eq.s32.totalorder %s97, 0
      %s100 = sadd.s32 %s99, 1
      %s101 = scalar_select %p98, %s99, %s100
      %p104 = pneg %p98
      %p105 = scmp.eq.s32.totalorder %s21, 1
      %p106 = por %p104, %p105
      %p107 = scmp.ne.s32.totalorder %s99, %s102
      %p108 = scmp.eq.s32.totalorder %s21, 0
      %p109 = por %p107, %p108
      %p110 = scmp.ne.s32.totalorder %s99, %s102
      %p111 = scmp.eq.s32.totalorder %s26, 1
      %p112 = por %p110, %p111
      %p113 = scmp.ne.s32.totalorder %s102, %s103
      %p114 = scmp.eq.s32.totalorder %s26, 0
      %p115 = por %p113, %p114
      %p116 = scmp.ne.s32.totalorder %s102, %s103
      %p117 = scmp.eq.s32.totalorder %s27, 1
      %p118 = por %p116, %p117
      %p120 = scmp.ne.s32.totalorder %s103, %s119
      %p121 = scmp.eq.s32.totalorder %s27, 0
      %p122 = por %p120, %p121
      %s123 = ssub.s32 %s21, %s28
      %p124 = scmp.eq.s32.totalorder %s123, 0
      %s126 = sadd.s32 %s125, 1
      %s127 = scalar_select %p124, %s125, %s126
      %p130 = pneg %p124
      %p131 = scmp.eq.s32.totalorder %s21, 1
      %p132 = por %p130, %p131
      %p133 = scmp.ne.s32.totalorder %s125, %s128
      %p134 = scmp.eq.s32.totalorder %s21, 0
      %p135 = por %p133, %p134
      %p136 = scmp.ne.s32.totalorder %s125, %s128
      %p137 = scmp.eq.s32.totalorder %s26, 1
      %p138 = por %p136, %p137
      %p139 = scmp.ne.s32.totalorder %s128, %s129
      %p140 = scmp.eq.s32.totalorder %s26, 0
      %p141 = por %p139, %p140
      %p142 = scmp.ne.s32.totalorder %s128, %s129
      %p143 = scmp.eq.s32.totalorder %s27, 1
      %p144 = por %p142, %p143
      %p146 = scmp.ne.s32.totalorder %s129, %s145
      %p147 = scmp.eq.s32.totalorder %s27, 0
      %p148 = por %p146, %p147
      %p149 = scmp.le.s32.totalorder 1, %s21
      %p150 = scmp.lt.s32.totalorder %s21, 3
      %p151 = pnand %p149, %p150
      %p152 = pneg %p151
      // Predicated region
      $region9: #{tpu_custom_call.1} parent=5 // pred_check
        _
      $region10: #{tpu_custom_call.1} parent=5 // pred_check_branch
        %154 = sbr.rel (%p151) target = $region12
      $region11: #{tpu_custom_call.1} parent=5 // pred_region
        %s155 = ssub.s32 %s21, 1
        // Predicated region
        $region13: #{tpu_custom_call.1} parent=11 // pred_check
          %p156 = pneg %p68
        $region14: #{tpu_custom_call.1} parent=11 // pred_check_branch
          %158 = sbr.rel (%p156) target = $region16
        $region15: #{tpu_custom_call.1} parent=11 // pred_region
          %s160 = ssub.s32 4096, 4096
          %161 = vsyncadd [#allocation6], %s160
          %s162 = sshll.u32 [#allocation5], 4
          %s163 = int_to_ptr.vmem [resolvable:$true] %s162
          %168 = dma.hbm_to_vmem [thread:$0]  %s1, 4096, %s163, [#allocation6], 256, 256, 16
        $region16: #{tpu_custom_call.1} parent=11 // pred_fallthru
          _
        // Predicated region
        $region17: #{tpu_custom_call.1} parent=11 // pred_check
          %p169 = pneg %p89
        $region18: #{tpu_custom_call.1} parent=11 // pred_check_branch
          %171 = sbr.rel (%p169) target = $region20
        $region19: #{tpu_custom_call.1} parent=11 // pred_region
          _
        $region20: #{tpu_custom_call.1} parent=11 // pred_fallthru
          _
      $region12: #{tpu_custom_call.1} parent=5 // pred_fallthru
        _
      %p172 = scmp.lt.s32.totalorder %s21, 2
      // Predicated region
      $region21: #{tpu_custom_call.1} parent=5 // pred_check
        %p173 = pneg %p172
      $region22: #{tpu_custom_call.1} parent=5 // pred_check_branch
        %175 = sbr.rel (%p173) target = $region24
      $region23: #{tpu_custom_call.1} parent=5 // pred_region
        // Predicated region
        $region25: #{tpu_custom_call.1} parent=23 // pred_check
          %p176 = pneg %p41
        $region26: #{tpu_custom_call.1} parent=23 // pred_check_branch
          %178 = sbr.rel (%p176) target = $region28
        $region27: #{tpu_custom_call.1} parent=23 // pred_region
          %s179 = sand.u32 %s31, 1
          %s180 = scalar_lea.sflag [#allocation3], %s179
          %s181 = sand.u32 %s31, 1
          %s182 = smul.addr %s181, 128
          %s183 = scalar_lea.vmem [#allocation2], %s182
          %s184 = smul.u32 16, %s21
          %s186 = ssub.s32 2048, 2048
          %187 = vsyncadd %s180, %s186
          %s188 = smul.addr %s184, 128
          %s189 = scalar_lea.hbm %s0, %s188
          %s190 = sshll.u32 %s183, 4
          %s191 = int_to_ptr.vmem [resolvable:$true] %s190
          %196 = dma.hbm_to_vmem [thread:$0]  %s189, 2048, %s191, %s180, 128, 128, 8
        $region28: #{tpu_custom_call.1} parent=23 // pred_fallthru
          _
      $region24: #{tpu_custom_call.1} parent=5 // pred_fallthru
        _
      %p197 = scmp.le.s32.totalorder 1, %s21
      %p198 = scmp.lt.s32.totalorder %s21, 3
      %p199 = pnand %p197, %p198
      %p200 = pneg %p199
      // Predicated region
      $region29: #{tpu_custom_call.1} parent=5 // pred_check
        _
      $region30: #{tpu_custom_call.1} parent=5 // pred_check_branch
        %202 = sbr.rel (%p199) target = $region32
      $region31: #{tpu_custom_call.1} parent=5 // pred_region
        %s203 = ssub.s32 %s21, 1
        %s204 = sand.u32 %s34, 1
        %s205 = scalar_lea.sflag [#allocation3], %s204
        %s206 = sand.u32 %s34, 1
        %s207 = smul.addr %s206, 128
        %s208 = scalar_lea.vmem [#allocation2], %s207
        // Predicated region
        $region33: #{tpu_custom_call.1} parent=31 // pred_check
          %p209 = pneg %p47
        $region34: #{tpu_custom_call.1} parent=31 // pred_check_branch
          %211 = sbr.rel (%p209) target = $region36
        $region35: #{tpu_custom_call.1} parent=31 // pred_region
          %212 = dma.done %s205, 2048
        $region36: #{tpu_custom_call.1} parent=31 // pred_fallthru
          _
        // Predicated region
        $region37: #{tpu_custom_call.1} parent=31 // pred_check
          %p213 = pneg %p68
        $region38: #{tpu_custom_call.1} parent=31 // pred_check_branch
          %215 = sbr.rel (%p213) target = $region40
        $region39: #{tpu_custom_call.1} parent=31 // pred_region
          %216 = dma.done [#allocation6], 4096
        $region40: #{tpu_custom_call.1} parent=31 // pred_fallthru
          _
        %s217 = sand.u32 %s34, 1
        %s218 = scalar_lea.sflag [#allocation3], %s217
        %s219 = sand.u32 %s34, 1
        %s220 = smul.addr %s219, 128
        %s221 = scalar_lea.vmem [#allocation2], %s220
        %p222 = pneg %p47
        %p223 = pneg %p44
        %p224 = pneg %p68
        %p225 = pneg %p65
        %p226 = pneg %p89
        %p227 = pneg %p86
        %p228 = pneg %p115
        %p229 = pneg %p112
        %s230 = sand.u32 %s102, 1
        %s231 = scalar_lea.sflag [#allocation4], %s230
        %s232 = sand.u32 %s102, 1
        %s233 = smul.addr %s232, 128
        %s234 = scalar_lea.vmem [#allocation7], %s233
        %p235 = pneg %p141
        %p236 = pneg %p138
        %s237 = sand.u32 %s128, 1
        %s238 = scalar_lea.sflag [#allocation9], %s237
        %s239 = sand.u32 %s128, 1
        %s240 = smul.addr %s239, 128
        %s241 = scalar_lea.vmem [#allocation8], %s240
        %s242 = smul.u32 16, %s26
        %s243 = smul.u32 16, %s26
        %s244 = smul.u32 16, %s26
        %v245 = vld [vmem:[%s208] sm:$0xff]
        %v246 = vld [vmem:[%s208 + $0x8] sm:$0xff]
        %v247 = vld [vmem:[%s208 + $0x10] sm:$0xff]
        %v248 = vld [vmem:[%s208 + $0x18] sm:$0xff]
        %v249 = vld [vmem:[%s208 + $0x20] sm:$0xff]
        %v250 = vld [vmem:[%s208 + $0x28] sm:$0xff]
        %v251 = vld [vmem:[%s208 + $0x30] sm:$0xff]
        %v252 = vld [vmem:[%s208 + $0x38] sm:$0xff]
        %v253 = vld [vmem:[%s208 + $0x40] sm:$0xff]
        %v254 = vld [vmem:[%s208 + $0x48] sm:$0xff]
        %v255 = vld [vmem:[%s208 + $0x50] sm:$0xff]
        %v256 = vld [vmem:[%s208 + $0x58] sm:$0xff]
        %v257 = vld [vmem:[%s208 + $0x60] sm:$0xff]
        %v258 = vld [vmem:[%s208 + $0x68] sm:$0xff]
        %v259 = vld [vmem:[%s208 + $0x70] sm:$0xff]
        %v260 = vld [vmem:[%s208 + $0x78] sm:$0xff]
        %v261 = vld [vmem:[#allocation5] sm:$0xff]
        %v262 = vld [vmem:[#allocation5 + $0x8] sm:$0xff]
        %v263 = vld [vmem:[#allocation5 + $0x10] sm:$0xff]
        %v264 = vld [vmem:[#allocation5 + $0x18] sm:$0xff]
        %v265 = vld [vmem:[#allocation5 + $0x20] sm:$0xff]
        %v266 = vld [vmem:[#allocation5 + $0x28] sm:$0xff]
        %v267 = vld [vmem:[#allocation5 + $0x30] sm:$0xff]
        %v268 = vld [vmem:[#allocation5 + $0x38] sm:$0xff]
        %v269 = vld [vmem:[#allocation5 + $0x40] sm:$0xff]
        %v270 = vld [vmem:[#allocation5 + $0x48] sm:$0xff]
        %v271 = vld [vmem:[#allocation5 + $0x50] sm:$0xff]
        %v272 = vld [vmem:[#allocation5 + $0x58] sm:$0xff]
        %v273 = vld [vmem:[#allocation5 + $0x60] sm:$0xff]
        %v274 = vld [vmem:[#allocation5 + $0x68] sm:$0xff]
        %v275 = vld [vmem:[#allocation5 + $0x70] sm:$0xff]
        %v276 = vld [vmem:[#allocation5 + $0x78] sm:$0xff]
        %v277 = vld [vmem:[#allocation5 + $0x80] sm:$0xff]
        %v278 = vld [vmem:[#allocation5 + $0x88] sm:$0xff]
        %v279 = vld [vmem:[#allocation5 + $0x90] sm:$0xff]
        %v280 = vld [vmem:[#allocation5 + $0x98] sm:$0xff]
        %v281 = vld [vmem:[#allocation5 + $0xa0] sm:$0xff]
        %v282 = vld [vmem:[#allocation5 + $0xa8] sm:$0xff]
        %v283 = vld [vmem:[#allocation5 + $0xb0] sm:$0xff]
        %v284 = vld [vmem:[#allocation5 + $0xb8] sm:$0xff]
        %v285 = vld [vmem:[#allocation5 + $0xc0] sm:$0xff]
        %v286 = vld [vmem:[#allocation5 + $0xc8] sm:$0xff]
        %v287 = vld [vmem:[#allocation5 + $0xd0] sm:$0xff]
        %v288 = vld [vmem:[#allocation5 + $0xd8] sm:$0xff]
        %v289 = vld [vmem:[#allocation5 + $0xe0] sm:$0xff]
        %v290 = vld [vmem:[#allocation5 + $0xe8] sm:$0xff]
        %v291 = vld [vmem:[#allocation5 + $0xf0] sm:$0xff]
        %v292 = vld [vmem:[#allocation5 + $0xf8] sm:$0xff]
        %293 = vmatprep.subr.mxu0 %v292
        %294 = vmatpush1.msra.mxu0 %v291
        %295 = vmatprep.subr.mxu0 %v290
        %296 = vmatpush1.msra.mxu0 %v289
        %297 = vmatprep.subr.mxu0 %v288
        %298 = vmatpush1.msra.mxu0 %v287
        %299 = vmatprep.subr.mxu0 %v286
        %300 = vmatpush1.msra.mxu0 %v285
        %301 = vmatprep.subr.mxu0 %v284
        %302 = vmatpush1.msra.mxu0 %v283
        %303 = vmatprep.subr.mxu0 %v282
        %304 = vmatpush1.msra.mxu0 %v281
        %305 = vmatprep.subr.mxu0 %v280
        %306 = vmatpush1.msra.mxu0 %v279
        %307 = vmatprep.subr.mxu0 %v278
        %308 = vmatpush1.msra.mxu0 %v277
        %309 = vmatprep.subr.mxu0 %v276
        %310 = vmatpush1.msra.mxu0 %v275
        %311 = vmatprep.subr.mxu0 %v274
        %312 = vmatpush1.msra.mxu0 %v273
        %313 = vmatprep.subr.mxu0 %v272
        %314 = vmatpush1.msra.mxu0 %v271
        %315 = vmatprep.subr.mxu0 %v270
        %316 = vmatpush1.msra.mxu0 %v269
        %317 = vmatprep.subr.mxu0 %v268
        %318 = vmatpush1.msra.mxu0 %v267
        %319 = vmatprep.subr.mxu0 %v266
        %320 = vmatpush1.msra.mxu0 %v265
        %321 = vmatprep.subr.mxu0 %v264
        %322 = vmatpush1.msra.mxu0 %v263
        %323 = vmatprep.subr.mxu0 %v262
        %324 = vmatpush1.msra.mxu0 %v261
        %325 = vmatprep.subr.mxu0 0.0
        %326 = vmatpush2.msra.mxu0 0.0
        %327 = vmatprep.subr.mxu0 0.0
        %328 = vmatpush2.msra.mxu0 0.0
        %329 = vmatprep.subr.mxu0 0.0
        %330 = vmatpush2.msra.mxu0 0.0
        %331 = vmatprep.subr.mxu0 0.0
        %332 = vmatpush2.msra.mxu0 0.0
        %333 = vmatprep.subr.mxu0 0.0
        %334 = vmatpush2.msra.mxu0 0.0
        %335 = vmatprep.subr.mxu0 0.0
        %336 = vmatpush2.msra.mxu0 0.0
        %337 = vmatprep.subr.mxu0 0.0
        %338 = vmatpush2.msra.mxu0 0.0
        %339 = vmatprep.subr.mxu0 0.0
        %340 = vmatpush2.msra.mxu0 0.0
        %341 = vmatprep.subr.mxu0 0.0
        %342 = vmatpush2.msra.mxu0 0.0
        %343 = vmatprep.subr.mxu0 0.0
        %344 = vmatpush2.msra.mxu0 0.0
        %345 = vmatprep.subr.mxu0 0.0
        %346 = vmatpush2.msra.mxu0 0.0
        %347 = vmatprep.subr.mxu0 0.0
        %348 = vmatpush2.msra.mxu0 0.0
        %349 = vmatprep.subr.mxu0 0.0
        %350 = vmatpush2.msra.mxu0 0.0
        %351 = vmatprep.subr.mxu0 0.0
        %352 = vmatpush2.msra.mxu0 0.0
        %353 = vmatprep.subr.mxu0 0.0
        %354 = vmatpush2.msra.mxu0 0.0
        %355 = vmatprep.subr.mxu0 0.0
        %356 = vmatpush2.msra.mxu0 0.0
        %357 = vmatprep.mubr.f32.mxu0 0.0
        %358 = vmatmul.mubr.f32.gmra.mxu0 %v245
        %v359 = vpop.f32.mrf.mxu0
        %v360 = vadd.f32 0.0, %v359
        %v361 = vpop.f32.mrf.mxu0
        %v362 = vadd.f32 0.0, %v361
        %363 = vmatprep.mubr.f32.mxu0 0.0
        %364 = vmatmul.mubr.f32.gmra.mxu0 %v246
        %v365 = vpop.f32.mrf.mxu0
        %v366 = vadd.f32 0.0, %v365
        %v367 = vpop.f32.mrf.mxu0
        %v368 = vadd.f32 0.0, %v367
        %369 = vmatprep.mubr.f32.mxu0 0.0
        %370 = vmatmul.mubr.f32.gmra.mxu0 %v247
        %v371 = vpop.f32.mrf.mxu0
        %v372 = vadd.f32 0.0, %v371
        %v373 = vpop.f32.mrf.mxu0
        %v374 = vadd.f32 0.0, %v373
        %375 = vmatprep.mubr.f32.mxu0 0.0
        %376 = vmatmul.mubr.f32.gmra.mxu0 %v248
        %v377 = vpop.f32.mrf.mxu0
        %v378 = vadd.f32 0.0, %v377
        %v379 = vpop.f32.mrf.mxu0
        %v380 = vadd.f32 0.0, %v379
        %381 = vmatprep.mubr.f32.mxu0 0.0
        %382 = vmatmul.mubr.f32.gmra.mxu0 %v249
        %v383 = vpop.f32.mrf.mxu0
        %v384 = vadd.f32 0.0, %v383
        %v385 = vpop.f32.mrf.mxu0
        %v386 = vadd.f32 0.0, %v385
        %387 = vmatprep.mubr.f32.mxu0 0.0
        %388 = vmatmul.mubr.f32.gmra.mxu0 %v250
        %v389 = vpop.f32.mrf.mxu0
        %v390 = vadd.f32 0.0, %v389
        %v391 = vpop.f32.mrf.mxu0
        %v392 = vadd.f32 0.0, %v391
        %393 = vmatprep.mubr.f32.mxu0 0.0
        %394 = vmatmul.mubr.f32.gmra.mxu0 %v251
        %v395 = vpop.f32.mrf.mxu0
        %v396 = vadd.f32 0.0, %v395
        %v397 = vpop.f32.mrf.mxu0
        %v398 = vadd.f32 0.0, %v397
        %399 = vmatprep.mubr.f32.mxu0 0.0
        %400 = vmatmul.mubr.f32.gmra.mxu0 %v252
        %v401 = vpop.f32.mrf.mxu0
        %v402 = vadd.f32 0.0, %v401
        %v403 = vpop.f32.mrf.mxu0
        %v404 = vadd.f32 0.0, %v403
        %405 = vmatprep.mubr.f32.mxu0 0.0
        %406 = vmatmul.mubr.f32.gmra.mxu0 %v253
        %v407 = vpop.f32.mrf.mxu0
        %v408 = vadd.f32 0.0, %v407
        %v409 = vpop.f32.mrf.mxu0
        %v410 = vadd.f32 0.0, %v409
        %411 = vmatprep.mubr.f32.mxu0 0.0
        %412 = vmatmul.mubr.f32.gmra.mxu0 %v254
        %v413 = vpop.f32.mrf.mxu0
        %v414 = vadd.f32 0.0, %v413
        %v415 = vpop.f32.mrf.mxu0
        %v416 = vadd.f32 0.0, %v415
        %417 = vmatprep.mubr.f32.mxu0 0.0
        %418 = vmatmul.mubr.f32.gmra.mxu0 %v255
        %v419 = vpop.f32.mrf.mxu0
        %v420 = vadd.f32 0.0, %v419
        %v421 = vpop.f32.mrf.mxu0
        %v422 = vadd.f32 0.0, %v421
        %423 = vmatprep.mubr.f32.mxu0 0.0
        %424 = vmatmul.mubr.f32.gmra.mxu0 %v256
        %v425 = vpop.f32.mrf.mxu0
        %v426 = vadd.f32 0.0, %v425
        %v427 = vpop.f32.mrf.mxu0
        %v428 = vadd.f32 0.0, %v427
        %429 = vmatprep.mubr.f32.mxu0 0.0
        %430 = vmatmul.mubr.f32.gmra.mxu0 %v257
        %v431 = vpop.f32.mrf.mxu0
        %v432 = vadd.f32 0.0, %v431
        %v433 = vpop.f32.mrf.mxu0
        %v434 = vadd.f32 0.0, %v433
        %435 = vmatprep.mubr.f32.mxu0 0.0
        %436 = vmatmul.mubr.f32.gmra.mxu0 %v258
        %v437 = vpop.f32.mrf.mxu0
        %v438 = vadd.f32 0.0, %v437
        %v439 = vpop.f32.mrf.mxu0
        %v440 = vadd.f32 0.0, %v439
        %441 = vmatprep.mubr.f32.mxu0 0.0
        %442 = vmatmul.mubr.f32.gmra.mxu0 %v259
        %v443 = vpop.f32.mrf.mxu0
        %v444 = vadd.f32 0.0, %v443
        %v445 = vpop.f32.mrf.mxu0
        %v446 = vadd.f32 0.0, %v445
        %447 = vmatprep.mubr.f32.mxu0 0.0
        %448 = vmatmul.mubr.f32.gmra.mxu0 %v260
        %v449 = vpop.f32.mrf.mxu0
        %v450 = vadd.f32 0.0, %v449
        %v451 = vpop.f32.mrf.mxu0
        %v452 = vadd.f32 0.0, %v451
        %453 = vdwg.mxu0
        %454 = vst [vmem:[%s234] sm:$0xff] %v360
        %455 = vst [vmem:[%s234 + $0x8] sm:$0xff] %v366
        %456 = vst [vmem:[%s234 + $0x10] sm:$0xff] %v372
        %457 = vst [vmem:[%s234 + $0x18] sm:$0xff] %v378
        %458 = vst [vmem:[%s234 + $0x20] sm:$0xff] %v384
        %459 = vst [vmem:[%s234 + $0x28] sm:$0xff] %v390
        %460 = vst [vmem:[%s234 + $0x30] sm:$0xff] %v396
        %461 = vst [vmem:[%s234 + $0x38] sm:$0xff] %v402
        %462 = vst [vmem:[%s234 + $0x40] sm:$0xff] %v408
        %463 = vst [vmem:[%s234 + $0x48] sm:$0xff] %v414
        %464 = vst [vmem:[%s234 + $0x50] sm:$0xff] %v420
        %465 = vst [vmem:[%s234 + $0x58] sm:$0xff] %v426
        %466 = vst [vmem:[%s234 + $0x60] sm:$0xff] %v432
        %467 = vst [vmem:[%s234 + $0x68] sm:$0xff] %v438
        %468 = vst [vmem:[%s234 + $0x70] sm:$0xff] %v444
        %469 = vst [vmem:[%s234 + $0x78] sm:$0xff] %v450
        %v470 = vld [vmem:[%s2] sm:$0x1]
        %v472 = vlaneseq
        %v473 = vshrl.u32 %v472, 7
        %v474 = vsub.s32 0, %v473
        %v475 = vrot.slane %v470, %v474
        %v477 = vadd.f32 %v362, %v475
        %v478 = vadd.f32 %v368, %v475
        %v479 = vadd.f32 %v374, %v475
        %v480 = vadd.f32 %v380, %v475
        %v481 = vadd.f32 %v386, %v475
        %v482 = vadd.f32 %v392, %v475
        %v483 = vadd.f32 %v398, %v475
        %v484 = vadd.f32 %v404, %v475
        %v485 = vadd.f32 %v410, %v475
        %v486 = vadd.f32 %v416, %v475
        %v487 = vadd.f32 %v422, %v475
        %v488 = vadd.f32 %v428, %v475
        %v489 = vadd.f32 %v434, %v475
        %v490 = vadd.f32 %v440, %v475
        %v491 = vadd.f32 %v446, %v475
        %v492 = vadd.f32 %v452, %v475
        %493 = vst [vmem:[%s241] sm:$0xff] %v477
        %494 = vst [vmem:[%s241 + $0x8] sm:$0xff] %v478
        %495 = vst [vmem:[%s241 + $0x10] sm:$0xff] %v479
        %496 = vst [vmem:[%s241 + $0x18] sm:$0xff] %v480
        %497 = vst [vmem:[%s241 + $0x20] sm:$0xff] %v481
        %498 = vst [vmem:[%s241 + $0x28] sm:$0xff] %v482
        %499 = vst [vmem:[%s241 + $0x30] sm:$0xff] %v483
        %500 = vst [vmem:[%s241 + $0x38] sm:$0xff] %v484
        %501 = vst [vmem:[%s241 + $0x40] sm:$0xff] %v485
        %502 = vst [vmem:[%s241 + $0x48] sm:$0xff] %v486
        %503 = vst [vmem:[%s241 + $0x50] sm:$0xff] %v487
        %504 = vst [vmem:[%s241 + $0x58] sm:$0xff] %v488
        %505 = vst [vmem:[%s241 + $0x60] sm:$0xff] %v489
        %506 = vst [vmem:[%s241 + $0x68] sm:$0xff] %v490
        %507 = vst [vmem:[%s241 + $0x70] sm:$0xff] %v491
        %508 = vst [vmem:[%s241 + $0x78] sm:$0xff] %v492
        %s509 = sand.u32 %s102, 1
        %s510 = scalar_lea.sflag [#allocation4], %s509
        %s511 = sand.u32 %s102, 1
        %s512 = smul.addr %s511, 128
        %s513 = scalar_lea.vmem [#allocation7], %s512
        %s514 = sand.u32 %s128, 1
        %s515 = scalar_lea.sflag [#allocation9], %s514
        %s516 = sand.u32 %s128, 1
        %s517 = smul.addr %s516, 128
        %s518 = scalar_lea.vmem [#allocation8], %s517
        // Predicated region
        $region41: #{tpu_custom_call.1} parent=31 // pred_check
          %p519 = pneg %p112
        $region42: #{tpu_custom_call.1} parent=31 // pred_check_branch
          %521 = sbr.rel (%p519) target = $region44
        $region43: #{tpu_custom_call.1} parent=31 // pred_region
          %s522 = smul.u32 16, %s26
          %s524 = ssub.s32 2048, 2048
          %525 = vsyncadd %s510, %s524
          %s526 = smul.addr %s522, 128
          %s527 = scalar_lea.hbm %s3, %s526
          %s528 = sshll.u32 %s513, 4
          %s529 = int_to_ptr.vmem [resolvable:$true] %s528
          %534 = dma.vmem_to_hbm [thread:$0]  %s529, 2048, %s527, %s510, 128, 128, 8
        $region44: #{tpu_custom_call.1} parent=31 // pred_fallthru
          _
        // Predicated region
        $region45: #{tpu_custom_call.1} parent=31 // pred_check
          %p535 = pneg %p138
        $region46: #{tpu_custom_call.1} parent=31 // pred_check_branch
          %537 = sbr.rel (%p535) target = $region48
        $region47: #{tpu_custom_call.1} parent=31 // pred_region
          %s538 = smul.u32 16, %s26
          %s540 = ssub.s32 2048, 2048
          %541 = vsyncadd %s515, %s540
          %s542 = smul.addr %s538, 128
          %s543 = scalar_lea.hbm %s4, %s542
          %s544 = sshll.u32 %s518, 4
          %s545 = int_to_ptr.vmem [resolvable:$true] %s544
          %550 = dma.vmem_to_hbm [thread:$0]  %s545, 2048, %s543, %s515, 128, 128, 8
        $region48: #{tpu_custom_call.1} parent=31 // pred_fallthru
          _
      $region32: #{tpu_custom_call.1} parent=5 // pred_fallthru
        _
      %p551 = scmp.le.s32.totalorder 2, %s21
      // Predicated region
      $region49: #{tpu_custom_call.1} parent=5 // pred_check
        %p552 = pneg %p551
      $region50: #{tpu_custom_call.1} parent=5 // pred_check_branch
        %554 = sbr.rel (%p552) target = $region52
      $region51: #{tpu_custom_call.1} parent=5 // pred_region
        %s555 = ssub.s32 %s21, 2
        // Predicated region
        $region53: #{tpu_custom_call.1} parent=51 // pred_check
          %p556 = pneg %p118
        $region54: #{tpu_custom_call.1} parent=51 // pred_check_branch
          %558 = sbr.rel (%p556) target = $region56
        $region55: #{tpu_custom_call.1} parent=51 // pred_region
          %s559 = sand.u32 %s103, 1
          %s560 = scalar_lea.sflag [#allocation4], %s559
          %s561 = sand.u32 %s103, 1
          %s562 = smul.addr %s561, 128
          %s563 = scalar_lea.vmem [#allocation7], %s562
          %564 = dma.done %s560, 2048
        $region56: #{tpu_custom_call.1} parent=51 // pred_fallthru
          _
        // Predicated region
        $region57: #{tpu_custom_call.1} parent=51 // pred_check
          %p565 = pneg %p144
        $region58: #{tpu_custom_call.1} parent=51 // pred_check_branch
          %567 = sbr.rel (%p565) target = $region60
        $region59: #{tpu_custom_call.1} parent=51 // pred_region
          %s568 = sand.u32 %s129, 1
          %s569 = scalar_lea.sflag [#allocation9], %s568
          %s570 = sand.u32 %s129, 1
          %s571 = smul.addr %s570, 128
          %s572 = scalar_lea.vmem [#allocation8], %s571
          %573 = dma.done %s569, 2048
        $region60: #{tpu_custom_call.1} parent=51 // pred_fallthru
          _
      $region52: #{tpu_custom_call.1} parent=5 // pred_fallthru
        _
    $region6: #{tpu_custom_call.1} parent=1 // loop_footer
      %s25 = sadd.s32 1, %s21
    $region7: #{tpu_custom_call.1} parent=1 // loop_footer_branch
      %20 = sbr.rel target = $region3
    $region8: #{tpu_custom_call.1} parent=1 // loop_exit
      _
    %574 = vsyncpa [#allocation3], 1
    %s575 = scalar_lea.sflag [#allocation3], 1
    %576 = vsyncpa %s575, 1
    %577 = vsyncpa [#allocation6], 1
    %578 = vsyncpa [#allocation4], 1
    %s579 = scalar_lea.sflag [#allocation4], 1
    %580 = vsyncpa %s579, 1
    %581 = vsyncpa [#allocation9], 1
    %s582 = scalar_lea.sflag [#allocation9], 1
    %583 = vsyncpa %s582, 1

</llo_original>
